<compile_context>
chip_gen: v7x
topology: tpu7x:2x2x1
jax: 0.10.0
libtpu: 0.0.40
codegen_flags: <defaults>
</compile_context>

<pallas_src>
import numpy as np
import jax
import jax.numpy as jnp
from jax.experimental import pallas as pl
from jax.experimental.pallas import tpu as pltpu

EPS = 1e-5


def round_up(x, m):
    return (x + m - 1) // m * m


def _cparams():
    # Explicit scoped-VMEM budget (safe on every generation); re-derive TN
    # (roughly halve it) for v7x's 64 MiB physical VMEM.
    return pltpu.CompilerParams(dimension_semantics=("parallel",),
                                vmem_limit_bytes=32 * 1024 * 1024)


# ----------------------------- Pallas kernels ------------------------------

def _frontend_kernel(x_ref, c_ref, wdt_ref, wp1_ref, res_ref, top_ref, p1_ref):
    """Fused pointwise front-end: downsample + linear_top as one concatenated
    matmul (raw, pre-BN) and pos_enc layer 1 (raw).  Channels on sublanes,
    points on lanes."""
    P = res_ref.shape[0]
    y = jnp.dot(wdt_ref[...], x_ref[...], preferred_element_type=jnp.float32)
    res_ref[...] = y[:P]
    top_ref[...] = y[P:]
    p1_ref[...] = jnp.dot(wp1_ref[...], c_ref[...], preferred_element_type=jnp.float32)


def _conv_vq1_kernel(xg_ref, w_ref, p1_ref, sp1_ref, bp1_ref, wp2_ref,
                     v_ref, q1_ref, p2_ref):
    """Fused v / q1 sparse convs (ks=3, shared gathered input, concatenated
    weights, raw pre-BN outputs) plus pos_enc layer 2 with the layer-1 BN
    folded into a (C,1) scale/bias."""
    P = v_ref.shape[0]
    y = jnp.dot(w_ref[...], xg_ref[...], preferred_element_type=jnp.float32)
    v_ref[...] = y[:P]
    q1_ref[...] = y[P:]
    p1a = jnp.maximum(p1_ref[...] * sp1_ref[...] + bp1_ref[...], 0.0)
    p2_ref[...] = jnp.dot(wp2_ref[...], p1a, preferred_element_type=jnp.float32)


def _matmul_kernel(x_ref, w_ref, o_ref):
    o_ref[...] = jnp.dot(w_ref[...], x_ref[...], preferred_element_type=jnp.float32)


def _attention_kernel(mask_ref, nbr_q_ref, agg_v_ref, q_ref,
                      w1_ref, b1_ref, w2_ref, b2_ref, o_ref):
    """TRBlock attention hot path.  Layout: points on lanes, kernel-offset
    axis K on sublanes, vec_dim / planes as leading dims.  The shallow
    map_qk matmuls (contraction 4 / planes) run as scalar-broadcast FMA chains
    on the VPU with the weights in SMEM; softmax reduces over the sublane
    (offset) axis; output is raw pre-out-BN."""
    V = nbr_q_ref.shape[0]
    H = b1_ref.shape[0]
    k_sel = agg_v_ref.shape[2]

    mask = mask_ref[...].astype(jnp.float32)                    # (K, TN)

    # q-difference per vec-dim channel (invalid offsets zeroed, as in the ref)
    neis = []
    for v in range(V):
        nq = nbr_q_ref[v].astype(jnp.float32)                   # (K, TN)
        neis.append((nq - q_ref[v]) * mask)

    # map_qk layer 1 (vec_dim -> planes): VPU scalar-FMA chain
    hs = []
    for hh in range(H):
        acc = neis[0] * w1_ref[0, hh]
        for v in range(1, V):
            acc = acc + neis[v] * w1_ref[v, hh]
        hs.append(jnp.maximum(acc + b1_ref[hh], 0.0))

    # map_qk layer 2 (planes -> vec_dim), masked logits, softmax over kernel
    # offsets, weighted sum of the pre-reduced neighbor v.  Only the first
    # k_sel softmax rows are consumed: the reference's group-local column
    # reuse was folded into agg_v by the host-side segment sum.
    for v in range(V):
        a = hs[0] * w2_ref[0, v]
        for hh in range(1, H):
            a = a + hs[hh] * w2_ref[hh, v]
        logits = (a + b2_ref[v]) * mask                         # (K, TN)
        m = jnp.max(logits, axis=0, keepdims=True)
        e = jnp.exp(logits - m)
        attn = e * pl.reciprocal(jnp.sum(e, axis=0, keepdims=True), approx=True)
        attn_sel = attn[:k_sel]                                 # (k_sel, TN)
        prod = agg_v_ref[v].astype(jnp.float32) * attn_sel[None]  # (rep, k_sel, TN)
        o_ref[v] = jnp.sum(prod, axis=1, keepdims=True)         # (rep, 1, TN)


def _bn_relu_add_kernel(y_ref, res_ref, s_ref, b_ref, o_ref):
    o_ref[...] = jnp.maximum(y_ref[...] * s_ref[...] + b_ref[...], 0.0) + res_ref[...]


# --------------------------- pallas_call wrappers ---------------------------

def frontend_call(xT, coordsT, wdtT, wp1T, tn):
    Cin, Np = xT.shape
    Cdt = wdtT.shape[0]
    P = wp1T.shape[0]
    flops = 2 * Np * (Cdt * Cin + P * 3)
    return pl.pallas_call(
        _frontend_kernel,
        grid=(Np // tn,),
        in_specs=[pl.BlockSpec((Cin, tn), lambda i: (0, i)),
                  pl.BlockSpec((3, tn), lambda i: (0, i)),
                  pl.BlockSpec(wdtT.shape, lambda i: (0, 0)),
                  pl.BlockSpec(wp1T.shape, lambda i: (0, 0))],
        out_specs=[pl.BlockSpec((Cdt // 2, tn), lambda i: (0, i)),
                   pl.BlockSpec((Cdt // 2, tn), lambda i: (0, i)),
                   pl.BlockSpec((P, tn), lambda i: (0, i))],
        out_shape=(jax.ShapeDtypeStruct((Cdt // 2, Np), jnp.float32),
                   jax.ShapeDtypeStruct((Cdt // 2, Np), jnp.float32),
                   jax.ShapeDtypeStruct((P, Np), jnp.float32)),
        compiler_params=_cparams(),
        cost_estimate=pl.CostEstimate(
            flops=int(flops), transcendentals=0,
            bytes_accessed=int(xT.size * 2 + coordsT.size * 2 + (Cdt + P) * Np * 4)),
    )(xT, coordsT, wdtT, wp1T)


def conv_vq1_call(xgT, wT, p1T, sp1, bp1, wp2T, tn):
    KC, Np = xgT.shape
    Cout = wT.shape[0]
    P = p1T.shape[0]
    V = wp2T.shape[0]
    flops = 2 * Np * (Cout * KC + V * P)
    return pl.pallas_call(
        _conv_vq1_kernel,
        grid=(Np // tn,),
        in_specs=[pl.BlockSpec((KC, tn), lambda i: (0, i)),
                  pl.BlockSpec(wT.shape, lambda i: (0, 0)),
                  pl.BlockSpec((P, tn), lambda i: (0, i)),
                  pl.BlockSpec((P, 1), lambda i: (0, 0)),
                  pl.BlockSpec((P, 1), lambda i: (0, 0)),
                  pl.BlockSpec(wp2T.shape, lambda i: (0, 0))],
        out_specs=[pl.BlockSpec((Cout // 2, tn), lambda i: (0, i)),
                   pl.BlockSpec((Cout // 2, tn), lambda i: (0, i)),
                   pl.BlockSpec((V, tn), lambda i: (0, i))],
        out_shape=(jax.ShapeDtypeStruct((Cout // 2, Np), jnp.float32),
                   jax.ShapeDtypeStruct((Cout // 2, Np), jnp.float32),
                   jax.ShapeDtypeStruct((V, Np), jnp.float32)),
        compiler_params=_cparams(),
        cost_estimate=pl.CostEstimate(
            flops=int(flops), transcendentals=0,
            bytes_accessed=int(xgT.size * 2 + wT.size * 2 + (Cout + V + P) * Np * 4)),
    )(xgT, wT, p1T, sp1, bp1, wp2T)


def matmul_call(xT, wT, tn):
    Cin, Np = xT.shape
    Cout = wT.shape[0]
    return pl.pallas_call(
        _matmul_kernel,
        grid=(Np // tn,),
        in_specs=[pl.BlockSpec((Cin, tn), lambda i: (0, i)),
                  pl.BlockSpec(wT.shape, lambda i: (0, 0))],
        out_specs=pl.BlockSpec((Cout, tn), lambda i: (0, i)),
        out_shape=jax.ShapeDtypeStruct((Cout, Np), jnp.float32),
        compiler_params=_cparams(),
        cost_estimate=pl.CostEstimate(
            flops=int(2 * Np * Cout * Cin), transcendentals=0,
            bytes_accessed=int(xT.size * 2 + wT.size * 2 + Cout * Np * 4)),
    )(xT, wT)


def attention_call(mask, nbr_q, agg_v, q_in, w1, b1, w2, b2, tn):
    K, Np = mask.shape
    V = nbr_q.shape[0]
    rep = agg_v.shape[1]
    k_sel = agg_v.shape[2]
    H = w1.shape[1]
    smem = pl.BlockSpec(memory_space=pltpu.MemorySpace.SMEM)
    flops = Np * K * (V + 4 * V * H + 2 * V) + 2 * Np * k_sel * V * rep
    bytes_acc = (mask.size + nbr_q.size + agg_v.size) * 2 + q_in.size * 4 + V * rep * Np * 4
    return pl.pallas_call(
        _attention_kernel,
        grid=(Np // tn,),
        in_specs=[pl.BlockSpec((K, tn), lambda i: (0, i)),
                  pl.BlockSpec((V, K, tn), lambda i: (0, 0, i)),
                  pl.BlockSpec((V, rep, k_sel, tn), lambda i: (0, 0, 0, i)),
                  pl.BlockSpec((V, 1, tn), lambda i: (0, 0, i)),
                  smem, smem, smem, smem],
        out_specs=pl.BlockSpec((V, rep, 1, tn), lambda i: (0, 0, 0, i)),
        out_shape=jax.ShapeDtypeStruct((V, rep, 1, Np), jnp.float32),
        compiler_params=_cparams(),
        cost_estimate=pl.CostEstimate(
            flops=int(flops), transcendentals=int(Np * K * V),
            bytes_accessed=int(bytes_acc)),
    )(mask, nbr_q, agg_v, q_in,
      w1.astype(jnp.float32), b1.astype(jnp.float32),
      w2.astype(jnp.float32), b2.astype(jnp.float32))


def bn_relu_add_call(yT, resT, s, b, tn):
    P, Np = yT.shape
    return pl.pallas_call(
        _bn_relu_add_kernel,
        grid=(Np // tn,),
        in_specs=[pl.BlockSpec((P, tn), lambda i: (0, i)),
                  pl.BlockSpec((P, tn), lambda i: (0, i)),
                  pl.BlockSpec((P, 1), lambda i: (0, 0)),
                  pl.BlockSpec((P, 1), lambda i: (0, 0))],
        out_specs=pl.BlockSpec((P, tn), lambda i: (0, i)),
        out_shape=jax.ShapeDtypeStruct((P, Np), jnp.float32),
        compiler_params=_cparams(),
    )(yT, resT, s, b)


# --------------------------- host-side glue --------------------------------

def bn_fold(yT, gamma, beta, n_valid):
    """Exact training-mode batch statistics over the (unpadded) point set,
    folded into a (C,1) scale/bias that the Pallas kernels apply."""
    y = yT[:, :n_valid]
    mean = jnp.mean(y, axis=1, keepdims=True)
    var = jnp.mean(jnp.square(y - mean), axis=1, keepdims=True)
    scale = gamma.reshape(-1, 1) * jax.lax.rsqrt(var + EPS)
    bias = beta.reshape(-1, 1) - mean * scale
    return scale, bias


def bn_relu_apply(yT, scale, bias):
    # Pointwise affine+ReLU applied in XLA only where the result immediately
    # feeds an XLA gather (it fuses with the gather producer).
    return jnp.maximum(yT * scale + bias, 0.0)


def gather_T(featT, idx, valid):
    """Channels-first neighbor gather: featT (C, Np), idx/valid (K, Np) ->
    (K*C, Np) bf16 with zero rows where there is no neighbor (XLA glue)."""
    g = featT[:, idx]                                  # (C, K, Np)
    g = jnp.where(valid[None], g, 0.0)
    K = idx.shape[0]
    C, Np = featT.shape
    return jnp.transpose(g, (1, 0, 2)).reshape(K * C, Np).astype(jnp.bfloat16)


def make_coords(n_points, grid_size, seed=0):
    rng = np.random.RandomState(seed)
    seen, coords = set(), []
    while len(coords) < n_points:
        c = tuple(int(v) for v in rng.randint(0, grid_size, size=3))
        if c not in seen:
            seen.add(c)
            coords.append(c)
    return np.array(coords, dtype=np.int32)


def kernel_offsets(kernel_size, dilation):
    if kernel_size % 2 == 1:
        r = range(-(kernel_size // 2), kernel_size // 2 + 1)
    else:
        r = range(kernel_size)
    offs = np.array([(i, j, k) for i in r for j in r for k in r], dtype=np.int32)
    return offs * dilation


def build_neighbor_map(coords, kernel_size, dilation):
    # TODO(synk): ME.CoordinateManager.get_kernel_map reproduced with a plain
    # python coordinate hash; (in_idx, out_idx) semantics kept, stored densely
    # as nbr[k, n] (-1 = no neighbor at that offset).
    lut = {tuple(c): i for i, c in enumerate(coords)}
    offs = kernel_offsets(kernel_size, dilation)
    nbr = np.full((len(offs), len(coords)), -1, dtype=np.int32)
    for k, off in enumerate(offs):
        for n, c in enumerate(coords):
            j = lut.get(tuple(c + off))
            if j is not None:
                nbr[k, n] = j
    return nbr


def init_params(key, inplanes, planes, vec_dim):
    ks = jax.random.split(key, 11)

    def w(k, shape, fan_in):
        return (jax.random.normal(k, shape, jnp.float32) / np.sqrt(fan_in)).astype(jnp.float32)

    p = {}
    p['W_down'] = w(ks[0], (inplanes, planes), inplanes)
    p['W_top'] = w(ks[1], (inplanes, planes), inplanes)
    p['W_q1'] = w(ks[2], (27, planes, planes), 27 * planes)
    p['W_q2'] = w(ks[3], (27, planes, vec_dim), 27 * planes)
    p['W_v'] = w(ks[4], (27, planes, planes), 27 * planes)
    p['W_p1'] = w(ks[5], (3, planes), 3)
    p['W_p2'] = w(ks[6], (planes, vec_dim), planes)
    p['W_mqk1'] = w(ks[7], (vec_dim, planes), vec_dim)
    p['b_mqk1'] = w(ks[8], (planes,), vec_dim)
    p['W_mqk2'] = w(ks[9], (planes, vec_dim), planes)
    p['b_mqk2'] = w(ks[10], (vec_dim,), planes)
    for name in ['top', 'q1', 'q2', 'v', 'p1', 'p2', 'out']:
        dim = {'q2': vec_dim, 'p2': vec_dim}.get(name, planes)
        p['gamma_' + name] = jnp.ones((dim,), jnp.float32)   # BN defaults
        p['beta_' + name] = jnp.zeros((dim,), jnp.float32)
    return p


def tr_block_forward(x_feat, coords, params, inplanes, planes, vec_dim, tn=128):
    N = x_feat.shape[0]
    P, V = planes, vec_dim
    rep = P // V
    Np = round_up(max(N, tn), tn)
    pad = Np - N

    # --- kernel maps for the three sparse-kernel groups (host/python glue) ---
    sparse_kernels = [np.arange(27), np.arange(8), np.arange(8)]
    kernel_sizes = [3, 2, 2]
    dilations = [1, 2, 3]
    nbr_groups, group_sizes = [], []
    nbr3 = None
    for ksz, dil, sk in zip(kernel_sizes, dilations, sparse_kernels):
        nbr_full = build_neighbor_map(coords, ksz, dil)
        if ksz == 3 and dil == 1:
            nbr3 = nbr_full
        present = sorted(k for k in sk.tolist() if (nbr_full[k] >= 0).any())
        group_sizes.append(len(present))
        for k in present:
            nbr_groups.append(nbr_full[k])
    nbr_all = jnp.asarray(np.pad(np.stack(nbr_groups, 0), ((0, 0), (0, pad)),
                                 constant_values=-1))            # (K, Np)
    nbr3 = jnp.asarray(np.pad(nbr3, ((0, 0), (0, pad)), constant_values=-1))
    k_sel = max(group_sizes)

    # channels-first, lane-dense inputs (point axis padded to a tile multiple)
    xT = jnp.pad(x_feat.T, ((0, 0), (0, pad))).astype(jnp.bfloat16)
    coordsT = jnp.pad(jnp.asarray(coords, jnp.float32).T,
                      ((0, 0), (0, pad))).astype(jnp.bfloat16)

    # ---- launch 1: downsample | linear_top | pos_enc layer 1 ----
    if inplanes != planes:
        wdtT = jnp.concatenate([params['W_down'], params['W_top']], axis=1).T
    else:
        eye = jnp.eye(planes, dtype=jnp.float32)
        wdtT = jnp.concatenate([eye, eye], axis=1).T
    res_raw, ytop_raw, p1_raw = frontend_call(
        xT, coordsT, wdtT.astype(jnp.bfloat16),
        params['W_p1'].T.astype(jnp.bfloat16), tn)
    if inplanes != planes:
        resT = res_raw
        s_top, b_top = bn_fold(ytop_raw, params['gamma_top'], params['beta_top'], N)
        xtopT = bn_relu_apply(ytop_raw, s_top, b_top)
    else:
        resT = xtopT = jnp.pad(x_feat.T.astype(jnp.float32), ((0, 0), (0, pad)))
    s_p1, b_p1 = bn_fold(p1_raw, params['gamma_p1'], params['beta_p1'], N)

    # ks=3 neighborhood gather (XLA glue)
    valid3 = nbr3 >= 0
    idx3 = jnp.where(valid3, nbr3, 0)
    # TODO(synk): the (27*planes, N) gathered conv input still round-trips HBM;
    # an in-kernel per-offset gather (neighbor table in SMEM) would remove it.
    xgT = gather_T(xtopT, idx3, valid3)                          # (27P, Np) bf16

    # ---- launch 2: fused v / q1 sparse convs + pos_enc layer 2 ----
    w_vq1T = jnp.concatenate([params['W_v'].reshape(27 * P, P),
                              params['W_q1'].reshape(27 * P, P)],
                             axis=1).T.astype(jnp.bfloat16)      # (2P, 27P)
    wp2T = params['W_p2'].T.astype(jnp.float32)                  # (V, P)
    v_raw, q1_raw, p2_raw = conv_vq1_call(xgT, w_vq1T, p1_raw, s_p1, b_p1, wp2T, tn)

    s_v, b_v = bn_fold(v_raw, params['gamma_v'], params['beta_v'], N)
    s_q1, b_q1 = bn_fold(q1_raw, params['gamma_q1'], params['beta_q1'], N)
    s_p2, b_p2 = bn_fold(p2_raw, params['gamma_p2'], params['beta_p2'], N)
    q1T = bn_relu_apply(q1_raw, s_q1, b_q1)
    peT = bn_relu_apply(p2_raw, s_p2, b_p2)                      # (V, Np)
    # vec_dim -> planes expansion is a row repeat, not a matmul
    vfT = bn_relu_apply(v_raw, s_v, b_v) + jnp.repeat(peT, rep, axis=0)

    # ---- launch 3: second q conv (ks=3) ----
    q1gT = gather_T(q1T, idx3, valid3)
    wq2T = params['W_q2'].reshape(27 * P, V).T.astype(jnp.bfloat16)
    q2_raw = matmul_call(q1gT, wq2T, tn)                         # (V, Np)
    s_q2, b_q2 = bn_fold(q2_raw, params['gamma_q2'], params['beta_q2'], N)
    qT = bn_relu_apply(q2_raw, s_q2, b_q2)

    # ---- attention inputs: validity mask, gathered q, group segment-summed v ----
    valid_all = nbr_all >= 0
    idx_all = jnp.where(valid_all, nbr_all, 0)
    x_nonzero = jnp.sum(jnp.abs(xtopT), axis=0) > 0.0            # |x| row test (as in the ref)
    mask = (valid_all & x_nonzero[idx_all]).astype(jnp.float32)  # (K, Np)
    nbr_qT = jnp.where(valid_all[None], qT[:, idx_all], 0.0).astype(jnp.bfloat16)  # (V,K,Np)
    nbr_v = jnp.where(mask[None] > 0, vfT[:, idx_all], 0.0)      # (P, K, Np)
    # fold the reference's group-local attention-column reuse into a segment sum
    agg = jnp.zeros((P, k_sel, Np), jnp.float32)
    off = 0
    for n_g in group_sizes:
        agg = agg.at[:, :n_g, :].add(nbr_v[:, off:off + n_g, :])
        off += n_g
    agg4 = agg.reshape(V, rep, k_sel, Np).astype(jnp.bfloat16)

    # ---- launch 4: attention hot path ----
    out4 = attention_call(mask.astype(jnp.bfloat16), nbr_qT, agg4,
                          qT.reshape(V, 1, Np),
                          params['W_mqk1'], params['b_mqk1'],
                          params['W_mqk2'], params['b_mqk2'], tn)  # (V, rep, 1, Np)
    out_raw = out4.reshape(P, Np)

    # ---- launch 5: out BN (folded batch stats) + ReLU + residual ----
    s_out, b_out = bn_fold(out_raw, params['gamma_out'], params['beta_out'], N)
    yT = bn_relu_add_call(out_raw, resT, s_out, b_out, tn)
    return yT[:, :N].T


if __name__ == "__main__":
    N, inplanes, planes, vec_dim = 512, 8, 16, 4
    coords = make_coords(N, grid_size=10, seed=0)

    key = jax.random.PRNGKey(0)
    kx, kp = jax.random.split(key)
    x_feat = jax.random.normal(kx, (N, inplanes), jnp.float32)
    params = init_params(kp, inplanes, planes, vec_dim)

    out = tr_block_forward(x_feat, coords, params, inplanes, planes, vec_dim, tn=128)
    out = jax.block_until_ready(out)
    assert out.shape == (N, planes)
    assert bool(jnp.all(jnp.isfinite(out)))
    print("KERNEL_OK")
</pallas_src>

<mosaic_0001>
module attributes {stable_mosaic.version = 11 : i64} {
  func.func @_frontend_kernel(%arg0: i32, %arg1: memref<8x128xbf16, #tpu.memory_space<vmem>>, %arg2: memref<3x128xbf16, #tpu.memory_space<vmem>>, %arg3: memref<32x8xbf16, #tpu.memory_space<vmem>>, %arg4: memref<16x3xbf16, #tpu.memory_space<vmem>>, %arg5: memref<16x128xf32, #tpu.memory_space<vmem>>, %arg6: memref<16x128xf32, #tpu.memory_space<vmem>>, %arg7: memref<16x128xf32, #tpu.memory_space<vmem>>) attributes {dimension_semantics = [#tpu.dimension_semantics<parallel>], iteration_bounds = array<i64: 4>, scalar_prefetch = 0 : i64, scratch_operands = 0 : i64, tpu.core_type = #tpu.core_type<tc>, window_params = [{transform_indices = @transform_0, window_bounds = array<i64: 8, 128>}, {transform_indices = @transform_1, window_bounds = array<i64: 3, 128>}, {pipeline_mode = #tpu.pipeline_mode<synchronous>, transform_indices = @transform_2, window_bounds = array<i64: 32, 8>}, {pipeline_mode = #tpu.pipeline_mode<synchronous>, transform_indices = @transform_3, window_bounds = array<i64: 16, 3>}, {transform_indices = @transform_4, window_bounds = array<i64: 16, 128>}, {transform_indices = @transform_5, window_bounds = array<i64: 16, 128>}, {transform_indices = @transform_6, window_bounds = array<i64: 16, 128>}]} {
    %c0 = arith.constant 0 : index
    %c0_0 = arith.constant 0 : index
    %0 = vector.load %arg3[%c0, %c0_0] : memref<32x8xbf16, #tpu.memory_space<vmem>>, vector<32x8xbf16>
    %c0_1 = arith.constant 0 : index
    %c0_2 = arith.constant 0 : index
    %1 = vector.load %arg1[%c0_1, %c0_2] : memref<8x128xbf16, #tpu.memory_space<vmem>>, vector<8x128xbf16>
    %cst = arith.constant dense<0.000000e+00> : vector<32x128xf32>
    %2 = tpu.matmul %0, %1, %cst {dimension_numbers = #tpu.dot_dimension_numbers<[1], [0], [0], [1], [0, 0, 1, 1], [], []>} : vector<32x8xbf16>, vector<8x128xbf16>, vector<32x128xf32> -> vector<32x128xf32>
    %3 = vector.extract_strided_slice %2 {offsets = [0, 0], sizes = [16, 128], strides = [1, 1]} : vector<32x128xf32> to vector<16x128xf32>
    %c0_3 = arith.constant 0 : index
    %c0_4 = arith.constant 0 : index
    %4 = vector.load %arg5[%c0_3, %c0_4] : memref<16x128xf32, #tpu.memory_space<vmem>>, vector<16x128xf32>
    tpu.vector_store %arg5[%c0_3, %c0_4], %3 {strides = array<i32>} : memref<16x128xf32, #tpu.memory_space<vmem>>, vector<16x128xf32>,
    %5 = vector.extract_strided_slice %2 {offsets = [16, 0], sizes = [16, 128], strides = [1, 1]} : vector<32x128xf32> to vector<16x128xf32>
    %c0_5 = arith.constant 0 : index
    %c0_6 = arith.constant 0 : index
    %6 = vector.load %arg6[%c0_5, %c0_6] : memref<16x128xf32, #tpu.memory_space<vmem>>, vector<16x128xf32>
    tpu.vector_store %arg6[%c0_5, %c0_6], %5 {strides = array<i32>} : memref<16x128xf32, #tpu.memory_space<vmem>>, vector<16x128xf32>,
    %c0_7 = arith.constant 0 : index
    %c0_8 = arith.constant 0 : index
    %7 = vector.load %arg4[%c0_7, %c0_8] : memref<16x3xbf16, #tpu.memory_space<vmem>>, vector<16x3xbf16>
    %c0_9 = arith.constant 0 : index
    %c0_10 = arith.constant 0 : index
    %8 = vector.load %arg2[%c0_9, %c0_10] : memref<3x128xbf16, #tpu.memory_space<vmem>>, vector<3x128xbf16>
    %cst_11 = arith.constant dense<0.000000e+00> : vector<16x128xf32>
    %9 = tpu.matmul %7, %8, %cst_11 {dimension_numbers = #tpu.dot_dimension_numbers<[1], [0], [0], [1], [0, 0, 1, 1], [], []>} : vector<16x3xbf16>, vector<3x128xbf16>, vector<16x128xf32> -> vector<16x128xf32>
    %c0_12 = arith.constant 0 : index
    %c0_13 = arith.constant 0 : index
    %10 = vector.load %arg7[%c0_12, %c0_13] : memref<16x128xf32, #tpu.memory_space<vmem>>, vector<16x128xf32>
    tpu.vector_store %arg7[%c0_12, %c0_13], %9 {strides = array<i32>} : memref<16x128xf32, #tpu.memory_space<vmem>>, vector<16x128xf32>,
    return
  }
  func.func @transform_0(%arg0: i32) -> (i32, i32) {
    %c0_i32 = arith.constant 0 : i32
    %c0_i32_0 = arith.constant 0 : i32
    return %c0_i32, %arg0 : i32, i32
  }
  func.func @transform_1(%arg0: i32) -> (i32, i32) {
    %c0_i32 = arith.constant 0 : i32
    %c0_i32_0 = arith.constant 0 : i32
    return %c0_i32, %arg0 : i32, i32
  }
  func.func @transform_2(%arg0: i32) -> (i32, i32) {
    %c0_i32 = arith.constant 0 : i32
    %c0_i32_0 = arith.constant 0 : i32
    %c0_i32_1 = arith.constant 0 : i32
    return %c0_i32, %c0_i32_0 : i32, i32
  }
  func.func @transform_3(%arg0: i32) -> (i32, i32) {
    %c0_i32 = arith.constant 0 : i32
    %c0_i32_0 = arith.constant 0 : i32
    %c0_i32_1 = arith.constant 0 : i32
    return %c0_i32, %c0_i32_0 : i32, i32
  }
  func.func @transform_4(%arg0: i32) -> (i32, i32) {
    %c0_i32 = arith.constant 0 : i32
    %c0_i32_0 = arith.constant 0 : i32
    return %c0_i32, %arg0 : i32, i32
  }
  func.func @transform_5(%arg0: i32) -> (i32, i32) {
    %c0_i32 = arith.constant 0 : i32
    %c0_i32_0 = arith.constant 0 : i32
    return %c0_i32, %arg0 : i32, i32
  }
  func.func @transform_6(%arg0: i32) -> (i32, i32) {
    %c0_i32 = arith.constant 0 : i32
    %c0_i32_0 = arith.constant 0 : i32
    return %c0_i32, %arg0 : i32, i32
  }
}

</mosaic_0001>

<llo_original>
// kernel: tpu_custom_call.1
$region0: #{tpu_custom_call.1}
  #allocation0 [shape = 'u32[]', space=smem, size = 0x4, offset = 0x4, fixed_abs, tag = 'smem constant byte address 0x4 - core index']
  #allocation1 [shape = 'u32[144,128]{1,0:T(1,128)}', space=vmem, size = 0x12000, scoped, tag = 'internal scratch']
  %s0 = inlined_call_operand.vmem [shape: bf16[8,512], index: 0, kind: input, shape index: {}]
  %s1 = inlined_call_operand.vmem [shape: bf16[3,512], index: 1, kind: input, shape index: {}]
  %s2 = inlined_call_operand.vmem [shape: bf16[32,8], index: 2, kind: input, shape index: {}]
  %s3 = inlined_call_operand.vmem [shape: bf16[16,3], index: 3, kind: input, shape index: {}]
  %s4 = inlined_call_operand.hbm [shape: f32[16,512], index: 4, kind: output, shape index: {0}]
  %s5 = inlined_call_operand.hbm [shape: f32[16,512], index: 5, kind: output, shape index: {1}]
  %s6 = inlined_call_operand.hbm [shape: f32[16,512], index: 6, kind: output, shape index: {2}]
  %7 = xla_tuple %s4, %s5, %s6
  %s8 = sld [smem:[#allocation0]]
  $region65: #{tpu_custom_call.1} parent=0
    _
  %s10 = ssub.s32 1, %s8
  %s11 = scalar_select 0, %s10, %s8
  $region1: #{tpu_custom_call.1} parent=0
    #allocation2 [shape = 'u8[16384]{0}', space=vmem, size = 0x4000, scoped, tag = 'output window, operand 0']
    #allocation3 [shape = 's32[2]{0}', space=sflag, size = 0x8, scoped, tag = 'scoped memory for tpu_custom_call.1']
    #allocation4 [shape = 'u8[16384]{0}', space=vmem, size = 0x4000, scoped, tag = 'output window, operand 1']
    #allocation5 [shape = 's32[2]{0}', space=sflag, size = 0x8, scoped, tag = 'scoped memory for tpu_custom_call.1']
    #allocation6 [shape = 'u8[16384]{0}', space=vmem, size = 0x4000, scoped, tag = 'output window, operand 2']
    %12 = vsyncpa [#allocation3], 0
    %s13 = scalar_lea.sflag [#allocation3], 1
    %14 = vsyncpa %s13, 0
    %15 = vsyncpa [#allocation5], 0
    %s16 = scalar_lea.sflag [#allocation5], 1
    %17 = vsyncpa %s16, 0
    loop: start=0, step=1, limit=6
    $region2: #{tpu_custom_call.1} parent=1 // loop_pre_header
      _
    $region3: #{tpu_custom_call.1} parent=1 // loop_header
      %s19 = sphi 0, %s23
      %p20 = scmp.ge.s32.totalorder %s19, 6
      %s29 = sphi 0, %s31
      %s32 = sphi 0, %s29
      %s33 = sphi 0, %s32
      %s49 = sphi 0, %s33
      %s55 = sphi 0, %s57
      %s58 = sphi 0, %s55
      %s59 = sphi 0, %s58
      %s75 = sphi 0, %s59
      %s79 = sphi 0, %s79
      %s81 = sphi 0, %s79
      %s82 = sphi 0, %s81
      %s96 = sphi 0, %s82
      %s100 = sphi 0, %s100
      %s102 = sphi 0, %s100
      %s103 = sphi 0, %s102
      %s117 = sphi 0, %s103
      %s123 = sphi 0, %s125
      %s126 = sphi 0, %s123
      %s127 = sphi 0, %s126
      %s143 = sphi 0, %s127
      %s149 = sphi 0, %s151
      %s152 = sphi 0, %s149
      %s153 = sphi 0, %s152
      %s169 = sphi 0, %s153
      %s175 = sphi 0, %s177
      %s178 = sphi 0, %s175
      %s179 = sphi 0, %s178
      %s195 = sphi 0, %s179
    $region4: #{tpu_custom_call.1} parent=1 // loop_header_branch
      %22 = sbr.rel (%p20) target = $region8
    $region5: #{tpu_custom_call.1} parent=1 // loop_body
      %s24 = ssub.s32 %s19, 1
      %s25 = ssub.s32 %s19, 2
      %s26 = sadd.s32 %s19, 1
      %s27 = ssub.s32 %s19, %s26
      %p28 = scmp.eq.s32.totalorder %s27, 0
      %s30 = sadd.s32 %s29, 1
      %s31 = scalar_select %p28, %s29, %s30
      %p34 = pneg %p28
      %p35 = scmp.eq.s32.totalorder %s19, 3
      %p36 = por %p34, %p35
      %p37 = scmp.ne.s32.totalorder %s29, %s32
      %p38 = scmp.eq.s32.totalorder %s19, 0
      %p39 = por %p37, %p38
      %p40 = scmp.ne.s32.totalorder %s29, %s32
      %p41 = scmp.eq.s32.totalorder %s24, 3
      %p42 = por %p40, %p41
      %p43 = scmp.ne.s32.totalorder %s32, %s33
      %p44 = scmp.eq.s32.totalorder %s24, 0
      %p45 = por %p43, %p44
      %p46 = scmp.ne.s32.totalorder %s32, %s33
      %p47 = scmp.eq.s32.totalorder %s25, 3
      %p48 = por %p46, %p47
      %p50 = scmp.ne.s32.totalorder %s33, %s49
      %p51 = scmp.eq.s32.totalorder %s25, 0
      %p52 = por %p50, %p51
      %s53 = ssub.s32 %s19, %s26
      %p54 = scmp.eq.s32.totalorder %s53, 0
      %s56 = sadd.s32 %s55, 1
      %s57 = scalar_select %p54, %s55, %s56
      %p60 = pneg %p54
      %p61 = scmp.eq.s32.totalorder %s19, 3
      %p62 = por %p60, %p61
      %p63 = scmp.ne.s32.totalorder %s55, %s58
      %p64 = scmp.eq.s32.totalorder %s19, 0
      %p65 = por %p63, %p64
      %p66 = scmp.ne.s32.totalorder %s55, %s58
      %p67 = scmp.eq.s32.totalorder %s24, 3
      %p68 = por %p66, %p67
      %p69 = scmp.ne.s32.totalorder %s58, %s59
      %p70 = scmp.eq.s32.totalorder %s24, 0
      %p71 = por %p69, %p70
      %p72 = scmp.ne.s32.totalorder %s58, %s59
      %p73 = scmp.eq.s32.totalorder %s25, 3
      %p74 = por %p72, %p73
      %p76 = scmp.ne.s32.totalorder %s59, %s75
      %p77 = scmp.eq.s32.totalorder %s25, 0
      %p78 = por %p76, %p77
      %s80 = sadd.s32 %s79, 1
      %p83 = scmp.eq.s32.totalorder %s19, 3
      %p84 = scmp.ne.s32.totalorder %s79, %s81
      %p85 = scmp.eq.s32.totalorder %s19, 0
      %p86 = por %p84, %p85
      %p87 = scmp.ne.s32.totalorder %s79, %s81
      %p88 = scmp.eq.s32.totalorder %s24, 3
      %p89 = por %p87, %p88
      %p90 = scmp.ne.s32.totalorder %s81, %s82
      %p91 = scmp.eq.s32.totalorder %s24, 0
      %p92 = por %p90, %p91
      %p93 = scmp.ne.s32.totalorder %s81, %s82
      %p94 = scmp.eq.s32.totalorder %s25, 3
      %p95 = por %p93, %p94
      %p97 = scmp.ne.s32.totalorder %s82, %s96
      %p98 = scmp.eq.s32.totalorder %s25, 0
      %p99 = por %p97, %p98
      %s101 = sadd.s32 %s100, 1
      %p104 = scmp.eq.s32.totalorder %s19, 3
      %p105 = scmp.ne.s32.totalorder %s100, %s102
      %p106 = scmp.eq.s32.totalorder %s19, 0
      %p107 = por %p105, %p106
      %p108 = scmp.ne.s32.totalorder %s100, %s102
      %p109 = scmp.eq.s32.totalorder %s24, 3
      %p110 = por %p108, %p109
      %p111 = scmp.ne.s32.totalorder %s102, %s103
      %p112 = scmp.eq.s32.totalorder %s24, 0
      %p113 = por %p111, %p112
      %p114 = scmp.ne.s32.totalorder %s102, %s103
      %p115 = scmp.eq.s32.totalorder %s25, 3
      %p116 = por %p114, %p115
      %p118 = scmp.ne.s32.totalorder %s103, %s117
      %p119 = scmp.eq.s32.totalorder %s25, 0
      %p120 = por %p118, %p119
      %s121 = ssub.s32 %s19, %s26
      %p122 = scmp.eq.s32.totalorder %s121, 0
      %s124 = sadd.s32 %s123, 1
      %s125 = scalar_select %p122, %s123, %s124
      %p128 = pneg %p122
      %p129 = scmp.eq.s32.totalorder %s19, 3
      %p130 = por %p128, %p129
      %p131 = scmp.ne.s32.totalorder %s123, %s126
      %p132 = scmp.eq.s32.totalorder %s19, 0
      %p133 = por %p131, %p132
      %p134 = scmp.ne.s32.totalorder %s123, %s126
      %p135 = scmp.eq.s32.totalorder %s24, 3
      %p136 = por %p134, %p135
      %p137 = scmp.ne.s32.totalorder %s126, %s127
      %p138 = scmp.eq.s32.totalorder %s24, 0
      %p139 = por %p137, %p138
      %p140 = scmp.ne.s32.totalorder %s126, %s127
      %p141 = scmp.eq.s32.totalorder %s25, 3
      %p142 = por %p140, %p141
      %p144 = scmp.ne.s32.totalorder %s127, %s143
      %p145 = scmp.eq.s32.totalorder %s25, 0
      %p146 = por %p144, %p145
      %s147 = ssub.s32 %s19, %s26
      %p148 = scmp.eq.s32.totalorder %s147, 0
      %s150 = sadd.s32 %s149, 1
      %s151 = scalar_select %p148, %s149, %s150
      %p154 = pneg %p148
      %p155 = scmp.eq.s32.totalorder %s19, 3
      %p156 = por %p154, %p155
      %p157 = scmp.ne.s32.totalorder %s149, %s152
      %p158 = scmp.eq.s32.totalorder %s19, 0
      %p159 = por %p157, %p158
      %p160 = scmp.ne.s32.totalorder %s149, %s152
      %p161 = scmp.eq.s32.totalorder %s24, 3
      %p162 = por %p160, %p161
      %p163 = scmp.ne.s32.totalorder %s152, %s153
      %p164 = scmp.eq.s32.totalorder %s24, 0
      %p165 = por %p163, %p164
      %p166 = scmp.ne.s32.totalorder %s152, %s153
      %p167 = scmp.eq.s32.totalorder %s25, 3
      %p168 = por %p166, %p167
      %p170 = scmp.ne.s32.totalorder %s153, %s169
      %p171 = scmp.eq.s32.totalorder %s25, 0
      %p172 = por %p170, %p171
      %s173 = ssub.s32 %s19, %s26
      %p174 = scmp.eq.s32.totalorder %s173, 0
      %s176 = sadd.s32 %s175, 1
      %s177 = scalar_select %p174, %s175, %s176
      %p180 = pneg %p174
      %p181 = scmp.eq.s32.totalorder %s19, 3
      %p182 = por %p180, %p181
      %p183 = scmp.ne.s32.totalorder %s175, %s178
      %p184 = scmp.eq.s32.totalorder %s19, 0
      %p185 = por %p183, %p184
      %p186 = scmp.ne.s32.totalorder %s175, %s178
      %p187 = scmp.eq.s32.totalorder %s24, 3
      %p188 = por %p186, %p187
      %p189 = scmp.ne.s32.totalorder %s178, %s179
      %p190 = scmp.eq.s32.totalorder %s24, 0
      %p191 = por %p189, %p190
      %p192 = scmp.ne.s32.totalorder %s178, %s179
      %p193 = scmp.eq.s32.totalorder %s25, 3
      %p194 = por %p192, %p193
      %p196 = scmp.ne.s32.totalorder %s179, %s195
      %p197 = scmp.eq.s32.totalorder %s25, 0
      %p198 = por %p196, %p197
      %p199 = scmp.le.s32.totalorder 1, %s19
      %p200 = scmp.lt.s32.totalorder %s19, 5
      %p201 = pnand %p199, %p200
      %p202 = pneg %p201
      // Predicated region
      $region9: #{tpu_custom_call.1} parent=5 // pred_check
        _
      $region10: #{tpu_custom_call.1} parent=5 // pred_check_branch
        %204 = sbr.rel (%p201) target = $region12
      $region11: #{tpu_custom_call.1} parent=5 // pred_region
        %s205 = ssub.s32 %s19, 1
        // Predicated region
        $region13: #{tpu_custom_call.1} parent=11 // pred_check
          %p206 = pneg %p92
        $region14: #{tpu_custom_call.1} parent=11 // pred_check_branch
          %208 = sbr.rel (%p206) target = $region16
        $region15: #{tpu_custom_call.1} parent=11 // pred_region
          _
        $region16: #{tpu_custom_call.1} parent=11 // pred_fallthru
          _
        // Predicated region
        $region17: #{tpu_custom_call.1} parent=11 // pred_check
          %p209 = pneg %p113
        $region18: #{tpu_custom_call.1} parent=11 // pred_check_branch
          %211 = sbr.rel (%p209) target = $region20
        $region19: #{tpu_custom_call.1} parent=11 // pred_region
          _
        $region20: #{tpu_custom_call.1} parent=11 // pred_fallthru
          _
      $region12: #{tpu_custom_call.1} parent=5 // pred_fallthru
        _
      %p212 = scmp.lt.s32.totalorder %s19, 4
      // Predicated region
      $region21: #{tpu_custom_call.1} parent=5 // pred_check
        %p213 = pneg %p212
      $region22: #{tpu_custom_call.1} parent=5 // pred_check_branch
        %215 = sbr.rel (%p213) target = $region24
      $region23: #{tpu_custom_call.1} parent=5 // pred_region
        // Predicated region
        $region25: #{tpu_custom_call.1} parent=23 // pred_check
          %p216 = pneg %p39
        $region26: #{tpu_custom_call.1} parent=23 // pred_check_branch
          %218 = sbr.rel (%p216) target = $region28
        $region27: #{tpu_custom_call.1} parent=23 // pred_region
          %p219 = scmp.lt.s32.totalorder %s19, 3
          %s220 = scalar_select %p219, %s19, 3
          %s221 = smul.addr %s220, 4
          %s222 = scalar_lea.vmem %s0, %s221
        $region28: #{tpu_custom_call.1} parent=23 // pred_fallthru
          _
        // Predicated region
        $region29: #{tpu_custom_call.1} parent=23 // pred_check
          %p223 = pneg %p65
        $region30: #{tpu_custom_call.1} parent=23 // pred_check_branch
          %225 = sbr.rel (%p223) target = $region32
        $region31: #{tpu_custom_call.1} parent=23 // pred_region
          %p226 = scmp.lt.s32.totalorder %s19, 3
          %s227 = scalar_select %p226, %s19, 3
          %s228 = smul.addr %s227, 2
          %s229 = scalar_lea.vmem %s1, %s228
        $region32: #{tpu_custom_call.1} parent=23 // pred_fallthru
          _
      $region24: #{tpu_custom_call.1} parent=5 // pred_fallthru
        _
      %p230 = scmp.le.s32.totalorder 1, %s19
      %p231 = scmp.lt.s32.totalorder %s19, 5
      %p232 = pnand %p230, %p231
      %p233 = pneg %p232
      // Predicated region
      $region33: #{tpu_custom_call.1} parent=5 // pred_check
        _
      $region34: #{tpu_custom_call.1} parent=5 // pred_check_branch
        %235 = sbr.rel (%p232) target = $region36
      $region35: #{tpu_custom_call.1} parent=5 // pred_region
        %s236 = ssub.s32 %s19, 1
        %p237 = scmp.lt.s32.totalorder %s24, 3
        %s238 = scalar_select %p237, %s24, 3
        %s239 = smul.addr %s238, 4
        %s240 = scalar_lea.vmem %s0, %s239
        %p241 = pneg %p45
        %p242 = pneg %p42
        %p243 = scmp.lt.s32.totalorder %s24, 3
        %s244 = scalar_select %p243, %s24, 3
        %s245 = smul.addr %s244, 2
        %s246 = scalar_lea.vmem %s1, %s245
        %p247 = pneg %p71
        %p248 = pneg %p68
        %p249 = pneg %p92
        %p250 = pneg %p89
        %p251 = pneg %p113
        %p252 = pneg %p110
        %p253 = pneg %p139
        %p254 = pneg %p136
        %s255 = sand.u32 %s126, 1
        %s256 = scalar_lea.sflag [#allocation3], %s255
        %s257 = sand.u32 %s126, 1
        %s258 = smul.addr %s257, 16
        %s259 = scalar_lea.vmem [#allocation2], %s258
        %p260 = pneg %p165
        %p261 = pneg %p162
        %s262 = sand.u32 %s24, 1
        %s263 = scalar_lea.sflag [#allocation5], %s262
        %s264 = sand.u32 %s152, 1
        %s265 = smul.addr %s264, 16
        %s266 = scalar_lea.vmem [#allocation4], %s265
        %p267 = pneg %p191
        %p268 = pneg %p188
        %s269 = sand.u32 %s24, 1
        %s270 = scalar_lea.sflag [#allocation5], %s269
        %s271 = sand.u32 %s178, 1
        %s272 = smul.addr %s271, 16
        %s273 = scalar_lea.vmem [#allocation6], %s272
        %p274 = scmp.lt.s32.totalorder %s24, 3
        %s275 = scalar_select %p274, %s24, 3
        %s276 = smul.addr %s275, 4
        %s277 = scalar_lea.vmem %s0, %s276
        %p278 = scmp.lt.s32.totalorder %s24, 3
        %s279 = scalar_select %p278, %s24, 3
        %s280 = smul.addr %s279, 2
        %s281 = scalar_lea.vmem %s1, %s280
        %v283 = vld [vmem:[%s2] sm:$0xf]
        %v284 = vld [vmem:[%s2 + $0x4] sm:$0xf]
        %v285 = vld [vmem:[%s2 + $0x8] sm:$0xf]
        %v286 = vld [vmem:[%s2 + $0xc] sm:$0xf]
        %v287 = vld [vmem:[%s277] sm:$0xf]
        %v292 = vunpack.c.l.b16 %v283
        %v293 = vunpack.c.l.b16 %v284
        %v294 = vunpack.c.l.b16 %v285
        %v295 = vunpack.c.l.b16 %v286
        %v296 = vpack.c.b16 %v293, %v292
        %v297 = vpack.c.b16 %v295, %v294
        %vm298 = vcmask 64512
        %v300 = vsel %vm298, %v296, 0
        %v303 = vsel %vm298, %v297, 0
        %vm305 = vcmask 1043456
        %v307 = vsel %vm305, %v287, 0
        %309 = vmatprep.subr.bf16.mxu0 0
        %310 = vmatpush1.bf16.msra.mxu0 %v307
        %311 = vmatprep.subr.bf16.mxu0 0
        %312 = vmatpush1.bf16.msra.mxu0 0
        %313 = vmatprep.subr.bf16.mxu0 0
        %314 = vmatpush1.bf16.msra.mxu0 0
        %315 = vmatprep.subr.bf16.mxu0 0
        %316 = vmatpush1.bf16.msra.mxu0 0
        %317 = vmatprep.subr.bf16.mxu0 0
        %318 = vmatpush1.bf16.msra.mxu0 0
        %319 = vmatprep.subr.bf16.mxu0 0
        %320 = vmatpush1.bf16.msra.mxu0 0
        %321 = vmatprep.subr.bf16.mxu0 0
        %322 = vmatpush1.bf16.msra.mxu0 0
        %323 = vmatprep.subr.bf16.mxu0 0
        %324 = vmatpush1.bf16.msra.mxu0 0
        %325 = vmatprep.subr.bf16.mxu0 0
        %326 = vmatpush1.bf16.msra.mxu0 0
        %327 = vmatprep.subr.bf16.mxu0 0
        %328 = vmatpush1.bf16.msra.mxu0 0
        %329 = vmatprep.subr.bf16.mxu0 0
        %330 = vmatpush1.bf16.msra.mxu0 0
        %331 = vmatprep.subr.bf16.mxu0 0
        %332 = vmatpush1.bf16.msra.mxu0 0
        %333 = vmatprep.subr.bf16.mxu0 0
        %334 = vmatpush1.bf16.msra.mxu0 0
        %335 = vmatprep.subr.bf16.mxu0 0
        %336 = vmatpush1.bf16.msra.mxu0 0
        %337 = vmatprep.subr.bf16.mxu0 0
        %338 = vmatpush1.bf16.msra.mxu0 0
        %339 = vmatprep.subr.bf16.mxu0 0
        %340 = vmatpush1.bf16.msra.mxu0 0
        %341 = vmatprep.mubr.bf16.mxu0 0
        %342 = vmatmul.mubr.bf16.gmra.mrb[0].mxu0 %v300
        %v343 = vpop.f32.mrb[0].mxu0
        %v344 = vadd.f32 0.0, %v343
        %v345 = vpop.f32.mrb[0].mxu0
        %v346 = vpop.f32.mrb[0].mxu0
        %v347 = vadd.f32 0.0, %v346
        %v348 = vpop.f32.mrb[0].mxu0
        %349 = vmatprep.mubr.bf16.mxu0 0
        %350 = vmatmul.mubr.bf16.gmra.mrb[0].mxu0 %v303
        %v351 = vpop.f32.mrb[0].mxu0
        %v352 = vadd.f32 0.0, %v351
        %v353 = vpop.f32.mrb[0].mxu0
        %v354 = vpop.f32.mrb[0].mxu0
        %v355 = vadd.f32 0.0, %v354
        %v356 = vpop.f32.mrb[0].mxu0
        %357 = vdwg.mxu0
        %358 = vst [vmem:[%s259] sm:$0xff] %v344
        %359 = vst [vmem:[%s259 + $0x8] sm:$0xff] %v347
        %360 = vst [vmem:[%s266] sm:$0xff] %v352
        %361 = vst [vmem:[%s266 + $0x8] sm:$0xff] %v355
        %v362 = vld [vmem:[%s3] sm:$0xf]
        %v363 = vld [vmem:[%s3 + $0x4] sm:$0xf]
        %v364 = vld [vmem:[%s281] sm:$0x3]
        %v367 = vunpack.c.l.b16 %v362
        %v368 = vunpack.c.l.b16 %v363
        %v369 = vpack.c.b16 %v368, %v367
        %vm370 = vcmask 23552
        %v372 = vsel %vm370, %v369, 0
        %vm374 = vcmask 1040384
        %vm375 = vcmask 1041408
        %v376 = vsel %vm374, 4294967295, 65535
        %v377 = vsel %vm375, %v376, 0
        %v379 = vand.u32 %v364, %v377
        %381 = vmatprep.subr.bf16.mxu0 0
        %382 = vmatpush1.bf16.msra.mxu0 %v379
        %383 = vmatprep.subr.bf16.mxu0 0
        %384 = vmatpush1.bf16.msra.mxu0 0
        %385 = vmatprep.subr.bf16.mxu0 0
        %386 = vmatpush1.bf16.msra.mxu0 0
        %387 = vmatprep.subr.bf16.mxu0 0
        %388 = vmatpush1.bf16.msra.mxu0 0
        %389 = vmatprep.subr.bf16.mxu0 0
        %390 = vmatpush1.bf16.msra.mxu0 0
        %391 = vmatprep.subr.bf16.mxu0 0
        %392 = vmatpush1.bf16.msra.mxu0 0
        %393 = vmatprep.subr.bf16.mxu0 0
        %394 = vmatpush1.bf16.msra.mxu0 0
        %395 = vmatprep.subr.bf16.mxu0 0
        %396 = vmatpush1.bf16.msra.mxu0 0
        %397 = vmatprep.subr.bf16.mxu0 0
        %398 = vmatpush1.bf16.msra.mxu0 0
        %399 = vmatprep.subr.bf16.mxu0 0
        %400 = vmatpush1.bf16.msra.mxu0 0
        %401 = vmatprep.subr.bf16.mxu0 0
        %402 = vmatpush1.bf16.msra.mxu0 0
        %403 = vmatprep.subr.bf16.mxu0 0
        %404 = vmatpush1.bf16.msra.mxu0 0
        %405 = vmatprep.subr.bf16.mxu0 0
        %406 = vmatpush1.bf16.msra.mxu0 0
        %407 = vmatprep.subr.bf16.mxu0 0
        %408 = vmatpush1.bf16.msra.mxu0 0
        %409 = vmatprep.subr.bf16.mxu0 0
        %410 = vmatpush1.bf16.msra.mxu0 0
        %411 = vmatprep.subr.bf16.mxu0 0
        %412 = vmatpush1.bf16.msra.mxu0 0
        %413 = vmatprep.mubr.bf16.mxu0 0
        %414 = vmatmul.mubr.bf16.gmra.mrb[0].mxu0 %v372
        %v415 = vpop.f32.mrb[0].mxu0
        %v416 = vadd.f32 0.0, %v415
        %v417 = vpop.f32.mrb[0].mxu0
        %v418 = vpop.f32.mrb[0].mxu0
        %v419 = vadd.f32 0.0, %v418
        %v420 = vpop.f32.mrb[0].mxu0
        %421 = vdwg.mxu0
        %422 = vst [vmem:[%s273] sm:$0xff] %v416
        %423 = vst [vmem:[%s273 + $0x8] sm:$0xff] %v419
        %s424 = sand.u32 %s126, 1
        %s425 = scalar_lea.sflag [#allocation3], %s424
        %s426 = sand.u32 %s126, 1
        %s427 = smul.addr %s426, 16
        %s428 = scalar_lea.vmem [#allocation2], %s427
        %s429 = sand.u32 %s24, 1
        %s430 = scalar_lea.sflag [#allocation5], %s429
        %s431 = sand.u32 %s152, 1
        %s432 = smul.addr %s431, 16
        %s433 = scalar_lea.vmem [#allocation4], %s432
        %s434 = sand.u32 %s24, 1
        %s435 = scalar_lea.sflag [#allocation5], %s434
        %s436 = sand.u32 %s178, 1
        %s437 = smul.addr %s436, 16
        %s438 = scalar_lea.vmem [#allocation6], %s437
        // Predicated region
        $region37: #{tpu_custom_call.1} parent=35 // pred_check
          %p439 = pneg %p136
        $region38: #{tpu_custom_call.1} parent=35 // pred_check_branch
          %441 = sbr.rel (%p439) target = $region40
        $region39: #{tpu_custom_call.1} parent=35 // pred_region
          %s443 = ssub.s32 256, 256
          %444 = vsyncadd %s425, %s443
          %s445 = smul.addr %s24, 128
          %s446 = scalar_lea.hbm %s4, %s445
          %s447 = sshll.u32 %s428, 4
          %s448 = int_to_ptr.vmem [resolvable:$true] %s447
          %453 = dma.vmem_to_hbm [thread:$0]  %s448, 256, %s446, %s425, 128, 512, 8
        $region40: #{tpu_custom_call.1} parent=35 // pred_fallthru
          _
        // Predicated region
        $region41: #{tpu_custom_call.1} parent=35 // pred_check
          %p454 = pneg %p162
        $region42: #{tpu_custom_call.1} parent=35 // pred_check_branch
          %456 = sbr.rel (%p454) target = $region44
        $region43: #{tpu_custom_call.1} parent=35 // pred_region
          %s458 = ssub.s32 256, 256
          %459 = vsyncadd %s430, %s458
          %s460 = smul.addr %s24, 128
          %s461 = scalar_lea.hbm %s5, %s460
          %s462 = sshll.u32 %s433, 4
          %s463 = int_to_ptr.vmem [resolvable:$true] %s462
          %468 = dma.vmem_to_hbm [thread:$0]  %s463, 256, %s461, %s430, 128, 512, 8
        $region44: #{tpu_custom_call.1} parent=35 // pred_fallthru
          _
        // Predicated region
        $region45: #{tpu_custom_call.1} parent=35 // pred_check
          %p469 = pneg %p188
        $region46: #{tpu_custom_call.1} parent=35 // pred_check_branch
          %471 = sbr.rel (%p469) target = $region48
        $region47: #{tpu_custom_call.1} parent=35 // pred_region
          %s473 = ssub.s32 256, 256
          %474 = vsyncadd %s435, %s473
          %s475 = smul.addr %s24, 128
          %s476 = scalar_lea.hbm %s6, %s475
          %s477 = sshll.u32 %s438, 4
          %s478 = int_to_ptr.vmem [resolvable:$true] %s477
          %483 = dma.vmem_to_hbm [thread:$0]  %s478, 256, %s476, %s435, 128, 512, 8
        $region48: #{tpu_custom_call.1} parent=35 // pred_fallthru
          _
      $region36: #{tpu_custom_call.1} parent=5 // pred_fallthru
        _
      %p484 = scmp.le.s32.totalorder 2, %s19
      // Predicated region
      $region49: #{tpu_custom_call.1} parent=5 // pred_check
        %p485 = pneg %p484
      $region50: #{tpu_custom_call.1} parent=5 // pred_check_branch
        %487 = sbr.rel (%p485) target = $region52
      $region51: #{tpu_custom_call.1} parent=5 // pred_region
        %s488 = ssub.s32 %s19, 2
        // Predicated region
        $region53: #{tpu_custom_call.1} parent=51 // pred_check
          %p489 = pneg %p142
        $region54: #{tpu_custom_call.1} parent=51 // pred_check_branch
          %491 = sbr.rel (%p489) target = $region56
        $region55: #{tpu_custom_call.1} parent=51 // pred_region
          %s492 = sand.u32 %s127, 1
          %s493 = scalar_lea.sflag [#allocation3], %s492
          %s494 = sand.u32 %s127, 1
          %s495 = smul.addr %s494, 16
          %s496 = scalar_lea.vmem [#allocation2], %s495
          %497 = dma.done %s493, 256
        $region56: #{tpu_custom_call.1} parent=51 // pred_fallthru
          _
        // Predicated region
        $region57: #{tpu_custom_call.1} parent=51 // pred_check
          %p498 = pneg %p168
        $region58: #{tpu_custom_call.1} parent=51 // pred_check_branch
          %500 = sbr.rel (%p498) target = $region60
        $region59: #{tpu_custom_call.1} parent=51 // pred_region
          %s501 = sand.u32 %s25, 1
          %s502 = scalar_lea.sflag [#allocation5], %s501
          %s503 = sand.u32 %s153, 1
          %s504 = smul.addr %s503, 16
          %s505 = scalar_lea.vmem [#allocation4], %s504
          %506 = dma.done %s502, 256
        $region60: #{tpu_custom_call.1} parent=51 // pred_fallthru
          _
        // Predicated region
        $region61: #{tpu_custom_call.1} parent=51 // pred_check
          %p507 = pneg %p194
        $region62: #{tpu_custom_call.1} parent=51 // pred_check_branch
          %509 = sbr.rel (%p507) target = $region64
        $region63: #{tpu_custom_call.1} parent=51 // pred_region
          %s510 = sand.u32 %s25, 1
          %s511 = scalar_lea.sflag [#allocation5], %s510
          %s512 = sand.u32 %s179, 1
          %s513 = smul.addr %s512, 16
          %s514 = scalar_lea.vmem [#allocation6], %s513
          %515 = dma.done %s511, 256
        $region64: #{tpu_custom_call.1} parent=51 // pred_fallthru
          _
      $region52: #{tpu_custom_call.1} parent=5 // pred_fallthru
        _
    $region6: #{tpu_custom_call.1} parent=1 // loop_footer
      %s23 = sadd.s32 1, %s19
    $region7: #{tpu_custom_call.1} parent=1 // loop_footer_branch
      %18 = sbr.rel target = $region3
    $region8: #{tpu_custom_call.1} parent=1 // loop_exit
      _
    %516 = vsyncpa [#allocation3], 1
    %s517 = scalar_lea.sflag [#allocation3], 1
    %518 = vsyncpa %s517, 1
    %519 = vsyncpa [#allocation5], 1
    %s520 = scalar_lea.sflag [#allocation5], 1
    %521 = vsyncpa %s520, 1

</llo_original>
